<compile_context>
chip_gen: v6e
topology: v6e:2x2x1
jax: 0.10.0
libtpu: 0.0.40
codegen_flags: <defaults>
</compile_context>

<pallas_src>
import jax
import jax.numpy as jnp
from jax.experimental import pallas as pl
from jax.experimental.pallas import tpu as pltpu


def _round_up(n: int, m: int) -> int:
    return ((n + m - 1) // m) * m


def _mlp_disc_kernel(x_ref,
                     w0_ref, b0_ref,
                     w1_ref, b1_ref,
                     w2_ref, b2_ref,
                     wo_ref, bo_ref,
                     out_ref, pre_ref):
    # Hidden FC layers: Linear + ReLU (MXU matmuls with f32 accumulate).
    h = x_ref[...]
    h = jnp.maximum(
        jnp.dot(h, w0_ref[...], preferred_element_type=jnp.float32) + b0_ref[...], 0.0)
    h = jnp.maximum(
        jnp.dot(h, w1_ref[...], preferred_element_type=jnp.float32) + b1_ref[...], 0.0)
    h = jnp.maximum(
        jnp.dot(h, w2_ref[...], preferred_element_type=jnp.float32) + b2_ref[...], 0.0)
    pre_ref[...] = h.astype(pre_ref.dtype)

    # Output layer: Linear(32 -> 1) + Sigmoid.
    # N=1 matmul is wasteful on the MXU -> VPU broadcast-multiply + XLU lane
    # reduction instead (these slots are otherwise idle in this mem-bound kernel).
    logits = jnp.sum(h * wo_ref[...], axis=-1, keepdims=True) + bo_ref[...]
    out_ref[...] = jax.nn.sigmoid(logits).astype(out_ref.dtype)


def mlp_discriminator(x, params, *, tb=512):
    """params: list of (W, b) with W of shape (in, out), b of shape (1, out)."""
    (w0, b0), (w1, b1), (w2, b2), (wo, bo) = params
    B, z_dim = x.shape
    pre_dim = w2.shape[1]

    # Output-layer weight as a (1, 32) row for the VPU reduce in the kernel.
    wo_row = wo.reshape(1, pre_dim)

    # Batch tile: multiple of 8 (f32 sublanes), capped at `tb` rows so the
    # double-buffered per-step footprint stays tiny (<1 MiB) on every chip.
    tile_b = min(tb, _round_up(max(B, 1), 8))
    b_pad = _round_up(B, tile_b)
    if b_pad != B:
        x = jnp.pad(x, ((0, b_pad - B), (0, 0)))

    def _const_spec(shape):
        # Parameters: same block every grid step -> stay VMEM-resident.
        return pl.BlockSpec(shape, lambda i: (0, 0))

    out, pre = pl.pallas_call(
        _mlp_disc_kernel,
        out_shape=(
            jax.ShapeDtypeStruct((b_pad, 1), jnp.float32),        # sigmoid output
            jax.ShapeDtypeStruct((b_pad, pre_dim), jnp.float32),  # pre_output
        ),
        grid=(b_pad // tile_b,),
        in_specs=[
            pl.BlockSpec((tile_b, z_dim), lambda i: (i, 0)),
            _const_spec(w0.shape), _const_spec(b0.shape),
            _const_spec(w1.shape), _const_spec(b1.shape),
            _const_spec(w2.shape), _const_spec(b2.shape),
            _const_spec(wo_row.shape), _const_spec(bo.shape),
        ],
        out_specs=(
            pl.BlockSpec((tile_b, 1), lambda i: (i, 0)),
            pl.BlockSpec((tile_b, pre_dim), lambda i: (i, 0)),
        ),
        compiler_params=pltpu.CompilerParams(
            dimension_semantics=("parallel",)),
    )(x, w0, b0, w1, b1, w2, b2, wo_row, bo)

    if b_pad != B:
        out = out[:B]
        pre = pre[:B]
    return out, pre


def init_params(key, z_dim, layers_dim=(64, 64, 32)):
    """Deterministic PyTorch-Linear-style init: U(-1/sqrt(in), 1/sqrt(in))."""
    dims = [z_dim] + list(layers_dim) + [1]
    params = []
    for in_d, out_d in zip(dims[:-1], dims[1:]):
        key, kw, kb = jax.random.split(key, 3)
        bound = 1.0 / jnp.sqrt(float(in_d))
        W = jax.random.uniform(kw, (in_d, out_d), jnp.float32, -bound, bound)
        b = jax.random.uniform(kb, (1, out_d), jnp.float32, -bound, bound)
        params.append((W, b))
    return params


def reference_forward(x, params):
    h = x
    for W, b in params[:-1]:
        h = jnp.maximum(h @ W + b, 0.0)
    Wo, bo = params[-1]
    return jax.nn.sigmoid(h @ Wo + bo), h


if __name__ == "__main__":
    key = jax.random.PRNGKey(0)
    k_x, k_p, k_x2 = jax.random.split(key, 3)

    B, z_dim = 8, 16
    x = jax.random.normal(k_x, (B, z_dim), jnp.float32)
    params = init_params(k_p, z_dim, layers_dim=(64, 64, 32))

    # Small-batch case (single tile).
    out, pre = mlp_discriminator(x, params)
    jax.block_until_ready((out, pre))
    ref_out, ref_pre = reference_forward(x, params)
    assert out.shape == (B, 1) and pre.shape == (B, 32)
    assert jnp.allclose(out, ref_out, atol=1e-5, rtol=1e-5)
    assert jnp.allclose(pre, ref_pre, atol=1e-5, rtol=1e-5)

    # Multi-tile case with a ragged batch (exercises grid + remainder padding).
    B2 = 1000
    x2 = jax.random.normal(k_x2, (B2, z_dim), jnp.float32)
    out2, pre2 = mlp_discriminator(x2, params)
    jax.block_until_ready((out2, pre2))
    ref_out2, ref_pre2 = reference_forward(x2, params)
    assert out2.shape == (B2, 1) and pre2.shape == (B2, 32)
    assert jnp.allclose(out2, ref_out2, atol=1e-5, rtol=1e-5)
    assert jnp.allclose(pre2, ref_pre2, atol=1e-5, rtol=1e-5)

    print("KERNEL_OK")
</pallas_src>

<mosaic_0001>
module attributes {stable_mosaic.version = 11 : i64} {
  func.func @_mlp_disc_kernel(%arg0: i32, %arg1: memref<8x16xf32, #tpu.memory_space<vmem>>, %arg2: memref<16x64xf32, #tpu.memory_space<vmem>>, %arg3: memref<1x64xf32, #tpu.memory_space<vmem>>, %arg4: memref<64x64xf32, #tpu.memory_space<vmem>>, %arg5: memref<1x64xf32, #tpu.memory_space<vmem>>, %arg6: memref<64x32xf32, #tpu.memory_space<vmem>>, %arg7: memref<1x32xf32, #tpu.memory_space<vmem>>, %arg8: memref<1x32xf32, #tpu.memory_space<vmem>>, %arg9: memref<1x1xf32, #tpu.memory_space<vmem>>, %arg10: memref<8x1xf32, #tpu.memory_space<vmem>>, %arg11: memref<8x32xf32, #tpu.memory_space<vmem>>) attributes {dimension_semantics = [#tpu.dimension_semantics<parallel>], iteration_bounds = array<i64: 1>, scalar_prefetch = 0 : i64, scratch_operands = 0 : i64, tpu.core_type = #tpu.core_type<tc>, window_params = [{transform_indices = @transform_0, window_bounds = array<i64: 8, 16>}, {pipeline_mode = #tpu.pipeline_mode<synchronous>, transform_indices = @transform_1, window_bounds = array<i64: 16, 64>}, {pipeline_mode = #tpu.pipeline_mode<synchronous>, transform_indices = @transform_2, window_bounds = array<i64: 1, 64>}, {pipeline_mode = #tpu.pipeline_mode<synchronous>, transform_indices = @transform_3, window_bounds = array<i64: 64, 64>}, {pipeline_mode = #tpu.pipeline_mode<synchronous>, transform_indices = @transform_4, window_bounds = array<i64: 1, 64>}, {pipeline_mode = #tpu.pipeline_mode<synchronous>, transform_indices = @transform_5, window_bounds = array<i64: 64, 32>}, {pipeline_mode = #tpu.pipeline_mode<synchronous>, transform_indices = @transform_6, window_bounds = array<i64: 1, 32>}, {pipeline_mode = #tpu.pipeline_mode<synchronous>, transform_indices = @transform_7, window_bounds = array<i64: 1, 32>}, {pipeline_mode = #tpu.pipeline_mode<synchronous>, transform_indices = @transform_8, window_bounds = array<i64: 1, 1>}, {transform_indices = @transform_9, window_bounds = array<i64: 8, 1>}, {transform_indices = @transform_10, window_bounds = array<i64: 8, 32>}]} {
    %c0 = arith.constant 0 : index
    %c0_0 = arith.constant 0 : index
    %0 = vector.load %arg1[%c0, %c0_0] : memref<8x16xf32, #tpu.memory_space<vmem>>, vector<8x16xf32>
    %c0_1 = arith.constant 0 : index
    %c0_2 = arith.constant 0 : index
    %1 = vector.load %arg2[%c0_1, %c0_2] : memref<16x64xf32, #tpu.memory_space<vmem>>, vector<16x64xf32>
    %cst = arith.constant dense<0.000000e+00> : vector<8x64xf32>
    %2 = tpu.matmul %0, %1, %cst {dimension_numbers = #tpu.dot_dimension_numbers<[1], [0], [0], [1], [0, 0, 1, 1], [], []>} : vector<8x16xf32>, vector<16x64xf32>, vector<8x64xf32> -> vector<8x64xf32>
    %c0_3 = arith.constant 0 : index
    %c0_4 = arith.constant 0 : index
    %3 = vector.load %arg3[%c0_3, %c0_4] : memref<1x64xf32, #tpu.memory_space<vmem>>, vector<1x64xf32>
    %4 = vector.broadcast %3 : vector<1x64xf32> to vector<8x64xf32>
    %5 = arith.addf %2, %4 : vector<8x64xf32>
    %cst_5 = arith.constant 0.000000e+00 : f32
    %6 = vector.broadcast %cst_5 : f32 to vector<8x64xf32>
    %7 = arith.maximumf %5, %6 : vector<8x64xf32>
    %c0_6 = arith.constant 0 : index
    %c0_7 = arith.constant 0 : index
    %8 = vector.load %arg4[%c0_6, %c0_7] : memref<64x64xf32, #tpu.memory_space<vmem>>, vector<64x64xf32>
    %cst_8 = arith.constant dense<0.000000e+00> : vector<8x64xf32>
    %9 = tpu.matmul %7, %8, %cst_8 {dimension_numbers = #tpu.dot_dimension_numbers<[1], [0], [0], [1], [0, 0, 1, 1], [], []>} : vector<8x64xf32>, vector<64x64xf32>, vector<8x64xf32> -> vector<8x64xf32>
    %c0_9 = arith.constant 0 : index
    %c0_10 = arith.constant 0 : index
    %10 = vector.load %arg5[%c0_9, %c0_10] : memref<1x64xf32, #tpu.memory_space<vmem>>, vector<1x64xf32>
    %11 = vector.broadcast %10 : vector<1x64xf32> to vector<8x64xf32>
    %12 = arith.addf %9, %11 : vector<8x64xf32>
    %cst_11 = arith.constant 0.000000e+00 : f32
    %13 = vector.broadcast %cst_11 : f32 to vector<8x64xf32>
    %14 = arith.maximumf %12, %13 : vector<8x64xf32>
    %c0_12 = arith.constant 0 : index
    %c0_13 = arith.constant 0 : index
    %15 = vector.load %arg6[%c0_12, %c0_13] : memref<64x32xf32, #tpu.memory_space<vmem>>, vector<64x32xf32>
    %cst_14 = arith.constant dense<0.000000e+00> : vector<8x32xf32>
    %16 = tpu.matmul %14, %15, %cst_14 {dimension_numbers = #tpu.dot_dimension_numbers<[1], [0], [0], [1], [0, 0, 1, 1], [], []>} : vector<8x64xf32>, vector<64x32xf32>, vector<8x32xf32> -> vector<8x32xf32>
    %c0_15 = arith.constant 0 : index
    %c0_16 = arith.constant 0 : index
    %17 = vector.load %arg7[%c0_15, %c0_16] : memref<1x32xf32, #tpu.memory_space<vmem>>, vector<1x32xf32>
    %18 = vector.broadcast %17 : vector<1x32xf32> to vector<8x32xf32>
    %19 = arith.addf %16, %18 : vector<8x32xf32>
    %cst_17 = arith.constant 0.000000e+00 : f32
    %20 = vector.broadcast %cst_17 : f32 to vector<8x32xf32>
    %21 = arith.maximumf %19, %20 : vector<8x32xf32>
    %c0_18 = arith.constant 0 : index
    %c0_19 = arith.constant 0 : index
    %22 = vector.load %arg11[%c0_18, %c0_19] : memref<8x32xf32, #tpu.memory_space<vmem>>, vector<8x32xf32>
    tpu.vector_store %arg11[%c0_18, %c0_19], %21 {strides = array<i32>} : memref<8x32xf32, #tpu.memory_space<vmem>>, vector<8x32xf32>,
    %c0_20 = arith.constant 0 : index
    %c0_21 = arith.constant 0 : index
    %23 = vector.load %arg8[%c0_20, %c0_21] : memref<1x32xf32, #tpu.memory_space<vmem>>, vector<1x32xf32>
    %24 = vector.broadcast %23 : vector<1x32xf32> to vector<8x32xf32>
    %25 = arith.mulf %21, %24 : vector<8x32xf32>
    %cst_22 = arith.constant dense<0.000000e+00> : vector<8xf32>
    %26 = vector.multi_reduction <add>, %25, %cst_22 [1] : vector<8x32xf32> to vector<8xf32>
    %27 = vector.shape_cast %26 : vector<8xf32> to vector<8x1xf32>
    %c0_23 = arith.constant 0 : index
    %c0_24 = arith.constant 0 : index
    %28 = vector.load %arg9[%c0_23, %c0_24] : memref<1x1xf32, #tpu.memory_space<vmem>>, vector<1x1xf32>
    %29 = vector.broadcast %28 : vector<1x1xf32> to vector<8x1xf32>
    %30 = arith.addf %27, %29 : vector<8x1xf32>
    %31 = arith.negf %30 : vector<8x1xf32>
    %32 = math.exp %31 : vector<8x1xf32>
    %cst_25 = arith.constant 1.000000e+00 : f32
    %33 = vector.broadcast %cst_25 : f32 to vector<8x1xf32>
    %34 = arith.addf %33, %32 : vector<8x1xf32>
    %35 = arith.divf %33, %34 : vector<8x1xf32>
    %c0_26 = arith.constant 0 : index
    %c0_27 = arith.constant 0 : index
    %36 = vector.load %arg10[%c0_26, %c0_27] : memref<8x1xf32, #tpu.memory_space<vmem>>, vector<8x1xf32>
    tpu.vector_store %arg10[%c0_26, %c0_27], %35 {strides = array<i32>} : memref<8x1xf32, #tpu.memory_space<vmem>>, vector<8x1xf32>,
    return
  }
  func.func @transform_0(%arg0: i32) -> (i32, i32) {
    %c0_i32 = arith.constant 0 : i32
    %c0_i32_0 = arith.constant 0 : i32
    return %arg0, %c0_i32 : i32, i32
  }
  func.func @transform_1(%arg0: i32) -> (i32, i32) {
    %c0_i32 = arith.constant 0 : i32
    %c0_i32_0 = arith.constant 0 : i32
    %c0_i32_1 = arith.constant 0 : i32
    return %c0_i32, %c0_i32_0 : i32, i32
  }
  func.func @transform_2(%arg0: i32) -> (i32, i32) {
    %c0_i32 = arith.constant 0 : i32
    %c0_i32_0 = arith.constant 0 : i32
    %c0_i32_1 = arith.constant 0 : i32
    return %c0_i32, %c0_i32_0 : i32, i32
  }
  func.func @transform_3(%arg0: i32) -> (i32, i32) {
    %c0_i32 = arith.constant 0 : i32
    %c0_i32_0 = arith.constant 0 : i32
    %c0_i32_1 = arith.constant 0 : i32
    return %c0_i32, %c0_i32_0 : i32, i32
  }
  func.func @transform_4(%arg0: i32) -> (i32, i32) {
    %c0_i32 = arith.constant 0 : i32
    %c0_i32_0 = arith.constant 0 : i32
    %c0_i32_1 = arith.constant 0 : i32
    return %c0_i32, %c0_i32_0 : i32, i32
  }
  func.func @transform_5(%arg0: i32) -> (i32, i32) {
    %c0_i32 = arith.constant 0 : i32
    %c0_i32_0 = arith.constant 0 : i32
    %c0_i32_1 = arith.constant 0 : i32
    return %c0_i32, %c0_i32_0 : i32, i32
  }
  func.func @transform_6(%arg0: i32) -> (i32, i32) {
    %c0_i32 = arith.constant 0 : i32
    %c0_i32_0 = arith.constant 0 : i32
    %c0_i32_1 = arith.constant 0 : i32
    return %c0_i32, %c0_i32_0 : i32, i32
  }
  func.func @transform_7(%arg0: i32) -> (i32, i32) {
    %c0_i32 = arith.constant 0 : i32
    %c0_i32_0 = arith.constant 0 : i32
    %c0_i32_1 = arith.constant 0 : i32
    return %c0_i32, %c0_i32_0 : i32, i32
  }
  func.func @transform_8(%arg0: i32) -> (i32, i32) {
    %c0_i32 = arith.constant 0 : i32
    %c0_i32_0 = arith.constant 0 : i32
    %c0_i32_1 = arith.constant 0 : i32
    return %c0_i32, %c0_i32_0 : i32, i32
  }
  func.func @transform_9(%arg0: i32) -> (i32, i32) {
    %c0_i32 = arith.constant 0 : i32
    %c0_i32_0 = arith.constant 0 : i32
    return %arg0, %c0_i32 : i32, i32
  }
  func.func @transform_10(%arg0: i32) -> (i32, i32) {
    %c0_i32 = arith.constant 0 : i32
    %c0_i32_0 = arith.constant 0 : i32
    return %arg0, %c0_i32 : i32, i32
  }
}

</mosaic_0001>

<llo_original>
// kernel: tpu_custom_call.1
$region0: #{tpu_custom_call.1}
  #allocation0 [shape = 'u32[]', space=smem, size = 0x4, offset = 0x4, fixed_abs, tag = 'smem constant byte address 0x4 - core index']
  #allocation1 [shape = 'u32[144,128]{1,0:T(1,128)}', space=vmem, size = 0x12000, scoped, tag = 'internal scratch']
  #allocation2 [shape = 'f32[1,1]{1,0:T(1,128)S(1)}', space=vmem, size = 0x200, scoped, tag = 'scoped memory for tpu_custom_call.1']
  %s0 = inlined_call_operand.vmem [shape: f32[8,16], index: 0, kind: input, shape index: {}]
  %s1 = inlined_call_operand.vmem [shape: f32[16,64], index: 1, kind: input, shape index: {}]
  %s2 = inlined_call_operand.vmem [shape: f32[1,64], index: 2, kind: input, shape index: {}]
  %s3 = inlined_call_operand.vmem [shape: f32[64,64], index: 3, kind: input, shape index: {}]
  %s4 = inlined_call_operand.vmem [shape: f32[1,64], index: 4, kind: input, shape index: {}]
  %s5 = inlined_call_operand.vmem [shape: f32[64,32], index: 5, kind: input, shape index: {}]
  %s6 = inlined_call_operand.vmem [shape: f32[1,32], index: 6, kind: input, shape index: {}]
  %s7 = inlined_call_operand.vmem [shape: f32[1,32], index: 7, kind: input, shape index: {}]
  %s8 = inlined_call_operand.<no memory space> [shape: f32[1,1], index: 8, kind: input, shape index: {}]
  %s9 = inlined_call_operand.vmem [shape: f32[8,1], index: 9, kind: output, shape index: {0}]
  %s10 = inlined_call_operand.hbm [shape: f32[8,32], index: 10, kind: output, shape index: {1}]
  %11 = xla_tuple %s9, %s10
  %s12 = sld [smem:[#allocation0]]
  $region54: #{tpu_custom_call.1} parent=0
    _
  %s14 = ssub.s32 1, %s12
  %s15 = scalar_select 0, %s14, %s12
  %v16 = vstv %s8
  %17 = vst [vmem:[#allocation2] sm:$0x1] %v16
  $region1: #{tpu_custom_call.1} parent=0
    #allocation3 [shape = 'u8[4096]{0}', space=vmem, size = 0x1000, scoped, tag = 'output window, operand 1, single buffered']
    #allocation4 [shape = 's32[1]{0}', space=sflag, size = 0x4, scoped, tag = 'scoped memory for tpu_custom_call.1']
    %18 = vsyncpa [#allocation4], 0
    // Predicated region
    $region2: #{tpu_custom_call.1} parent=1 // pred_check
      _
    $region3: #{tpu_custom_call.1} parent=1 // pred_check_branch
      %20 = sbr.rel (0) target = $region5
    $region4: #{tpu_custom_call.1} parent=1 // pred_region
      _
    $region5: #{tpu_custom_call.1} parent=1 // pred_fallthru
      _
    // Predicated region
    $region6: #{tpu_custom_call.1} parent=1 // pred_check
      _
    $region7: #{tpu_custom_call.1} parent=1 // pred_check_branch
      %22 = sbr.rel (0) target = $region9
    $region8: #{tpu_custom_call.1} parent=1 // pred_region
      _
    $region9: #{tpu_custom_call.1} parent=1 // pred_fallthru
      _
    // Predicated region
    $region10: #{tpu_custom_call.1} parent=1 // pred_check
      _
    $region11: #{tpu_custom_call.1} parent=1 // pred_check_branch
      %24 = sbr.rel (0) target = $region13
    $region12: #{tpu_custom_call.1} parent=1 // pred_region
      _
    $region13: #{tpu_custom_call.1} parent=1 // pred_fallthru
      _
    // Predicated region
    $region14: #{tpu_custom_call.1} parent=1 // pred_check
      _
    $region15: #{tpu_custom_call.1} parent=1 // pred_check_branch
      %26 = sbr.rel (0) target = $region17
    $region16: #{tpu_custom_call.1} parent=1 // pred_region
      _
    $region17: #{tpu_custom_call.1} parent=1 // pred_fallthru
      _
    // Predicated region
    $region18: #{tpu_custom_call.1} parent=1 // pred_check
      _
    $region19: #{tpu_custom_call.1} parent=1 // pred_check_branch
      %28 = sbr.rel (0) target = $region21
    $region20: #{tpu_custom_call.1} parent=1 // pred_region
      _
    $region21: #{tpu_custom_call.1} parent=1 // pred_fallthru
      _
    // Predicated region
    $region22: #{tpu_custom_call.1} parent=1 // pred_check
      _
    $region23: #{tpu_custom_call.1} parent=1 // pred_check_branch
      %30 = sbr.rel (0) target = $region25
    $region24: #{tpu_custom_call.1} parent=1 // pred_region
      _
    $region25: #{tpu_custom_call.1} parent=1 // pred_fallthru
      _
    // Predicated region
    $region26: #{tpu_custom_call.1} parent=1 // pred_check
      _
    $region27: #{tpu_custom_call.1} parent=1 // pred_check_branch
      %32 = sbr.rel (0) target = $region29
    $region28: #{tpu_custom_call.1} parent=1 // pred_region
      _
    $region29: #{tpu_custom_call.1} parent=1 // pred_fallthru
      _
    // Predicated region
    $region30: #{tpu_custom_call.1} parent=1 // pred_check
      _
    $region31: #{tpu_custom_call.1} parent=1 // pred_check_branch
      %34 = sbr.rel (0) target = $region33
    $region32: #{tpu_custom_call.1} parent=1 // pred_region
      _
    $region33: #{tpu_custom_call.1} parent=1 // pred_fallthru
      _
    // Predicated region
    $region34: #{tpu_custom_call.1} parent=1 // pred_check
      _
    $region35: #{tpu_custom_call.1} parent=1 // pred_check_branch
      %36 = sbr.rel (0) target = $region37
    $region36: #{tpu_custom_call.1} parent=1 // pred_region
      _
    $region37: #{tpu_custom_call.1} parent=1 // pred_fallthru
      _
    %v37 = vld [vmem:[%s0] sm:$0xff]
    %v38 = vld [vmem:[%s1] sm:$0xff]
    %v39 = vld [vmem:[%s1 + $0x8] sm:$0xff]
    %v40 = vld [vmem:[%s2] sm:$0x1]
    %v42 = vlaneseq
    %v43 = vshrl.u32 %v42, 7
    %v44 = vsub.s32 0, %v43
    %v45 = vrot.slane %v40, %v44
    %vm47 = vcmask 130048
    %v49 = vsel %vm47, %v37, 0
    %51 = vmatprep.subr.mxu0 0.0
    %52 = vmatpush1.msra.mxu0 0.0
    %53 = vmatprep.subr.mxu0 0.0
    %54 = vmatpush1.msra.mxu0 0.0
    %55 = vmatprep.subr.mxu0 0.0
    %56 = vmatpush1.msra.mxu0 0.0
    %57 = vmatprep.subr.mxu0 0.0
    %58 = vmatpush1.msra.mxu0 0.0
    %59 = vmatprep.subr.mxu0 0.0
    %60 = vmatpush1.msra.mxu0 0.0
    %61 = vmatprep.subr.mxu0 0.0
    %62 = vmatpush1.msra.mxu0 0.0
    %63 = vmatprep.subr.mxu0 0.0
    %64 = vmatpush1.msra.mxu0 0.0
    %65 = vmatprep.subr.mxu0 0.0
    %66 = vmatpush1.msra.mxu0 0.0
    %67 = vmatprep.subr.mxu0 0.0
    %68 = vmatpush1.msra.mxu0 0.0
    %69 = vmatprep.subr.mxu0 0.0
    %70 = vmatpush1.msra.mxu0 0.0
    %71 = vmatprep.subr.mxu0 0.0
    %72 = vmatpush1.msra.mxu0 0.0
    %73 = vmatprep.subr.mxu0 0.0
    %74 = vmatpush1.msra.mxu0 0.0
    %75 = vmatprep.subr.mxu0 0.0
    %76 = vmatpush1.msra.mxu0 0.0
    %77 = vmatprep.subr.mxu0 0.0
    %78 = vmatpush1.msra.mxu0 0.0
    %79 = vmatprep.subr.mxu0 0.0
    %80 = vmatpush1.msra.mxu0 %v39
    %81 = vmatprep.subr.mxu0 0.0
    %82 = vmatpush1.msra.mxu0 %v38
    %83 = vmatprep.subr.mxu0 0.0
    %84 = vmatpush2.msra.mxu0 0.0
    %85 = vmatprep.subr.mxu0 0.0
    %86 = vmatpush2.msra.mxu0 0.0
    %87 = vmatprep.subr.mxu0 0.0
    %88 = vmatpush2.msra.mxu0 0.0
    %89 = vmatprep.subr.mxu0 0.0
    %90 = vmatpush2.msra.mxu0 0.0
    %91 = vmatprep.subr.mxu0 0.0
    %92 = vmatpush2.msra.mxu0 0.0
    %93 = vmatprep.subr.mxu0 0.0
    %94 = vmatpush2.msra.mxu0 0.0
    %95 = vmatprep.subr.mxu0 0.0
    %96 = vmatpush2.msra.mxu0 0.0
    %97 = vmatprep.subr.mxu0 0.0
    %98 = vmatpush2.msra.mxu0 0.0
    %99 = vmatprep.subr.mxu0 0.0
    %100 = vmatpush2.msra.mxu0 0.0
    %101 = vmatprep.subr.mxu0 0.0
    %102 = vmatpush2.msra.mxu0 0.0
    %103 = vmatprep.subr.mxu0 0.0
    %104 = vmatpush2.msra.mxu0 0.0
    %105 = vmatprep.subr.mxu0 0.0
    %106 = vmatpush2.msra.mxu0 0.0
    %107 = vmatprep.subr.mxu0 0.0
    %108 = vmatpush2.msra.mxu0 0.0
    %109 = vmatprep.subr.mxu0 0.0
    %110 = vmatpush2.msra.mxu0 0.0
    %111 = vmatprep.subr.mxu0 0.0
    %112 = vmatpush2.msra.mxu0 0.0
    %113 = vmatprep.subr.mxu0 0.0
    %114 = vmatpush2.msra.mxu0 0.0
    %115 = vmatprep.mubr.f32.mxu0 0.0
    %116 = vmatmul.mubr.f32.gmra.mxu0 %v49
    %v117 = vpop.f32.mrf.mxu0
    %v118 = vadd.f32 %v45, %v117
    %v119 = vpop.f32.mrf.mxu0
    %120 = vdwg.mxu0
    %v121 = vmax.f32 %v118, 0.0
    %v122 = vld [vmem:[%s3] sm:$0xff]
    %v123 = vld [vmem:[%s3 + $0x8] sm:$0xff]
    %v124 = vld [vmem:[%s3 + $0x10] sm:$0xff]
    %v125 = vld [vmem:[%s3 + $0x18] sm:$0xff]
    %v126 = vld [vmem:[%s3 + $0x20] sm:$0xff]
    %v127 = vld [vmem:[%s3 + $0x28] sm:$0xff]
    %v128 = vld [vmem:[%s3 + $0x30] sm:$0xff]
    %v129 = vld [vmem:[%s3 + $0x38] sm:$0xff]
    %v130 = vld [vmem:[%s4] sm:$0x1]
    %v132 = vlaneseq
    %v133 = vshrl.u32 %v132, 7
    %v134 = vsub.s32 0, %v133
    %v135 = vrot.slane %v130, %v134
    %vm137 = vcmask 523264
    %v139 = vsel %vm137, %v121, 0
    %141 = vmatprep.subr.mxu0 0.0
    %142 = vmatpush1.msra.mxu0 0.0
    %143 = vmatprep.subr.mxu0 0.0
    %144 = vmatpush1.msra.mxu0 0.0
    %145 = vmatprep.subr.mxu0 0.0
    %146 = vmatpush1.msra.mxu0 0.0
    %147 = vmatprep.subr.mxu0 0.0
    %148 = vmatpush1.msra.mxu0 0.0
    %149 = vmatprep.subr.mxu0 0.0
    %150 = vmatpush1.msra.mxu0 0.0
    %151 = vmatprep.subr.mxu0 0.0
    %152 = vmatpush1.msra.mxu0 0.0
    %153 = vmatprep.subr.mxu0 0.0
    %154 = vmatpush1.msra.mxu0 0.0
    %155 = vmatprep.subr.mxu0 0.0
    %156 = vmatpush1.msra.mxu0 0.0
    %157 = vmatprep.subr.mxu0 0.0
    %158 = vmatpush1.msra.mxu0 %v129
    %159 = vmatprep.subr.mxu0 0.0
    %160 = vmatpush1.msra.mxu0 %v128
    %161 = vmatprep.subr.mxu0 0.0
    %162 = vmatpush1.msra.mxu0 %v127
    %163 = vmatprep.subr.mxu0 0.0
    %164 = vmatpush1.msra.mxu0 %v126
    %165 = vmatprep.subr.mxu0 0.0
    %166 = vmatpush1.msra.mxu0 %v125
    %167 = vmatprep.subr.mxu0 0.0
    %168 = vmatpush1.msra.mxu0 %v124
    %169 = vmatprep.subr.mxu0 0.0
    %170 = vmatpush1.msra.mxu0 %v123
    %171 = vmatprep.subr.mxu0 0.0
    %172 = vmatpush1.msra.mxu0 %v122
    %173 = vmatprep.subr.mxu0 0.0
    %174 = vmatpush2.msra.mxu0 0.0
    %175 = vmatprep.subr.mxu0 0.0
    %176 = vmatpush2.msra.mxu0 0.0
    %177 = vmatprep.subr.mxu0 0.0
    %178 = vmatpush2.msra.mxu0 0.0
    %179 = vmatprep.subr.mxu0 0.0
    %180 = vmatpush2.msra.mxu0 0.0
    %181 = vmatprep.subr.mxu0 0.0
    %182 = vmatpush2.msra.mxu0 0.0
    %183 = vmatprep.subr.mxu0 0.0
    %184 = vmatpush2.msra.mxu0 0.0
    %185 = vmatprep.subr.mxu0 0.0
    %186 = vmatpush2.msra.mxu0 0.0
    %187 = vmatprep.subr.mxu0 0.0
    %188 = vmatpush2.msra.mxu0 0.0
    %189 = vmatprep.subr.mxu0 0.0
    %190 = vmatpush2.msra.mxu0 0.0
    %191 = vmatprep.subr.mxu0 0.0
    %192 = vmatpush2.msra.mxu0 0.0
    %193 = vmatprep.subr.mxu0 0.0
    %194 = vmatpush2.msra.mxu0 0.0
    %195 = vmatprep.subr.mxu0 0.0
    %196 = vmatpush2.msra.mxu0 0.0
    %197 = vmatprep.subr.mxu0 0.0
    %198 = vmatpush2.msra.mxu0 0.0
    %199 = vmatprep.subr.mxu0 0.0
    %200 = vmatpush2.msra.mxu0 0.0
    %201 = vmatprep.subr.mxu0 0.0
    %202 = vmatpush2.msra.mxu0 0.0
    %203 = vmatprep.subr.mxu0 0.0
    %204 = vmatpush2.msra.mxu0 0.0
    %205 = vmatprep.mubr.f32.mxu0 0.0
    %206 = vmatmul.mubr.f32.gmra.mxu0 %v139
    %v207 = vpop.f32.mrf.mxu0
    %v208 = vadd.f32 %v135, %v207
    %v209 = vpop.f32.mrf.mxu0
    %210 = vdwg.mxu0
    %v211 = vmax.f32 %v208, 0.0
    %v212 = vld [vmem:[%s5] sm:$0xff]
    %v213 = vld [vmem:[%s5 + $0x8] sm:$0xff]
    %v214 = vld [vmem:[%s5 + $0x10] sm:$0xff]
    %v215 = vld [vmem:[%s5 + $0x18] sm:$0xff]
    %v216 = vld [vmem:[%s5 + $0x20] sm:$0xff]
    %v217 = vld [vmem:[%s5 + $0x28] sm:$0xff]
    %v218 = vld [vmem:[%s5 + $0x30] sm:$0xff]
    %v219 = vld [vmem:[%s5 + $0x38] sm:$0xff]
    %v220 = vld [vmem:[%s6] sm:$0x1]
    %v222 = vlaneseq
    %v223 = vshrl.u32 %v222, 7
    %v224 = vsub.s32 0, %v223
    %v225 = vrot.slane %v220, %v224
    %v228 = vsel %vm137, %v211, 0
    %230 = vmatprep.subr.mxu0 0.0
    %231 = vmatpush1.msra.mxu0 0.0
    %232 = vmatprep.subr.mxu0 0.0
    %233 = vmatpush1.msra.mxu0 0.0
    %234 = vmatprep.subr.mxu0 0.0
    %235 = vmatpush1.msra.mxu0 0.0
    %236 = vmatprep.subr.mxu0 0.0
    %237 = vmatpush1.msra.mxu0 0.0
    %238 = vmatprep.subr.mxu0 0.0
    %239 = vmatpush1.msra.mxu0 0.0
    %240 = vmatprep.subr.mxu0 0.0
    %241 = vmatpush1.msra.mxu0 0.0
    %242 = vmatprep.subr.mxu0 0.0
    %243 = vmatpush1.msra.mxu0 0.0
    %244 = vmatprep.subr.mxu0 0.0
    %245 = vmatpush1.msra.mxu0 0.0
    %246 = vmatprep.subr.mxu0 0.0
    %247 = vmatpush1.msra.mxu0 %v219
    %248 = vmatprep.subr.mxu0 0.0
    %249 = vmatpush1.msra.mxu0 %v218
    %250 = vmatprep.subr.mxu0 0.0
    %251 = vmatpush1.msra.mxu0 %v217
    %252 = vmatprep.subr.mxu0 0.0
    %253 = vmatpush1.msra.mxu0 %v216
    %254 = vmatprep.subr.mxu0 0.0
    %255 = vmatpush1.msra.mxu0 %v215
    %256 = vmatprep.subr.mxu0 0.0
    %257 = vmatpush1.msra.mxu0 %v214
    %258 = vmatprep.subr.mxu0 0.0
    %259 = vmatpush1.msra.mxu0 %v213
    %260 = vmatprep.subr.mxu0 0.0
    %261 = vmatpush1.msra.mxu0 %v212
    %262 = vmatprep.subr.mxu0 0.0
    %263 = vmatpush2.msra.mxu0 0.0
    %264 = vmatprep.subr.mxu0 0.0
    %265 = vmatpush2.msra.mxu0 0.0
    %266 = vmatprep.subr.mxu0 0.0
    %267 = vmatpush2.msra.mxu0 0.0
    %268 = vmatprep.subr.mxu0 0.0
    %269 = vmatpush2.msra.mxu0 0.0
    %270 = vmatprep.subr.mxu0 0.0
    %271 = vmatpush2.msra.mxu0 0.0
    %272 = vmatprep.subr.mxu0 0.0
    %273 = vmatpush2.msra.mxu0 0.0
    %274 = vmatprep.subr.mxu0 0.0
    %275 = vmatpush2.msra.mxu0 0.0
    %276 = vmatprep.subr.mxu0 0.0
    %277 = vmatpush2.msra.mxu0 0.0
    %278 = vmatprep.subr.mxu0 0.0
    %279 = vmatpush2.msra.mxu0 0.0
    %280 = vmatprep.subr.mxu0 0.0
    %281 = vmatpush2.msra.mxu0 0.0
    %282 = vmatprep.subr.mxu0 0.0
    %283 = vmatpush2.msra.mxu0 0.0
    %284 = vmatprep.subr.mxu0 0.0
    %285 = vmatpush2.msra.mxu0 0.0
    %286 = vmatprep.subr.mxu0 0.0
    %287 = vmatpush2.msra.mxu0 0.0
    %288 = vmatprep.subr.mxu0 0.0
    %289 = vmatpush2.msra.mxu0 0.0
    %290 = vmatprep.subr.mxu0 0.0
    %291 = vmatpush2.msra.mxu0 0.0
    %292 = vmatprep.subr.mxu0 0.0
    %293 = vmatpush2.msra.mxu0 0.0
    %294 = vmatprep.mubr.f32.mxu0 0.0
    %295 = vmatmul.mubr.f32.gmra.mxu0 %v228
    %v296 = vpop.f32.mrf.mxu0
    %v297 = vadd.f32 %v225, %v296
    %v298 = vpop.f32.mrf.mxu0
    %299 = vdwg.mxu0
    %v300 = vmax.f32 %v297, 0.0
    %vm301 = vcmask 261120
    %302 = vst.msk [vmem:[#allocation3] sm:$0xff] %vm301, %v300
    %v303 = vld [vmem:[%s7] sm:$0x1]
    %v305 = vlaneseq
    %v306 = vshrl.u32 %v305, 7
    %v307 = vsub.s32 0, %v306
    %v308 = vrot.slane %v303, %v307
    %v310 = vmul.f32 %v300, %v308
    %v311 = vsel %vm301, %v310, 0.0
    %312 = vadd.xlane.f32.xlu0 %v311
    %v313 = vpop.xlane.xlu0 %312
    %v314 = vld [vmem:[#allocation2] sm:$0x1]
    %v316 = vlaneseq
    %v317 = vshrl.u32 %v316, 7
    %v318 = vsub.s32 0, %v317
    %v319 = vrot.slane %v314, %v318
    %v321 = vadd.f32 %v313, %v319
    %v322 = vxor.u32 %v321, 2147483648
    %v323 = vmul.f32 %v322, 1.442695
    %v324 = vpow.pop %v323
    %v325 = vadd.f32 %v324, 1.0
    %v326 = vrcp.pop %v325
    %v327 = vmul.f32 1.0, %v326
    %vm328 = vcmask 7168
    %329 = vst.msk [vmem:[%s9] sm:$0xff] %vm328, %v327
    // Predicated region
    $region38: #{tpu_custom_call.1} parent=1 // pred_check
      _
    $region39: #{tpu_custom_call.1} parent=1 // pred_check_branch
      %331 = sbr.rel (0) target = $region41
    $region40: #{tpu_custom_call.1} parent=1 // pred_region
      _
    $region41: #{tpu_custom_call.1} parent=1 // pred_fallthru
      _
    // Predicated region
    $region42: #{tpu_custom_call.1} parent=1 // pred_check
      _
    $region43: #{tpu_custom_call.1} parent=1 // pred_check_branch
      %333 = sbr.rel (0) target = $region45
    $region44: #{tpu_custom_call.1} parent=1 // pred_region
      %s335 = ssub.s32 128, 128
      %336 = vsyncadd [#allocation4], %s335
      %s338 = sshll.u32 [#allocation3], 4
      %s339 = int_to_ptr.vmem [resolvable:$true] %s338
      %341 = dma.vmem_to_hbm [thread:$0]  %s339, 128, %s10, [#allocation4]
    $region45: #{tpu_custom_call.1} parent=1 // pred_fallthru
      _
    // Predicated region
    $region46: #{tpu_custom_call.1} parent=1 // pred_check
      _
    $region47: #{tpu_custom_call.1} parent=1 // pred_check_branch
      %343 = sbr.rel (0) target = $region49
    $region48: #{tpu_custom_call.1} parent=1 // pred_region
      _
    $region49: #{tpu_custom_call.1} parent=1 // pred_fallthru
      _
    // Predicated region
    $region50: #{tpu_custom_call.1} parent=1 // pred_check
      _
    $region51: #{tpu_custom_call.1} parent=1 // pred_check_branch
      %345 = sbr.rel (0) target = $region53
    $region52: #{tpu_custom_call.1} parent=1 // pred_region
      %346 = dma.done [#allocation4], 128
    $region53: #{tpu_custom_call.1} parent=1 // pred_fallthru
      _
    %347 = vsyncpa [#allocation4], 1

</llo_original>
